<compile_context>
chip_gen: v5e
topology: v5e:2x2
jax: 0.10.0
libtpu: 0.0.40
codegen_flags: <defaults>
</compile_context>

<pallas_src>
import jax
import jax.numpy as jnp
from jax.experimental import pallas as pl
from jax.experimental.pallas import tpu as pltpu


def _round_up(a: int, m: int) -> int:
    return (a + m - 1) // m * m


def _mlp_kernel(x_ref, w1_ref, b1_ref, w2_ref, b2_ref, w3_ref, b3_ref, o_ref):
    # x_ref: (TB, D) f32 tile of the batch; weights bf16, biases f32.
    x = x_ref[...].astype(jnp.bfloat16)

    # fc1 + ReLU (MXU bf16 x bf16 -> f32 accumulate)
    h1 = jnp.dot(x, w1_ref[...], preferred_element_type=jnp.float32)
    h1 = jnp.maximum(h1 + b1_ref[...], 0.0).astype(jnp.bfloat16)

    # fc2 + ReLU
    h2 = jnp.dot(h1, w2_ref[...], preferred_element_type=jnp.float32)
    h2 = jnp.maximum(h2 + b2_ref[...], 0.0).astype(jnp.bfloat16)

    # fc3 (no activation)
    h3 = jnp.dot(h2, w3_ref[...], preferred_element_type=jnp.float32)
    h3 = h3 + b3_ref[...]

    o_ref[...] = h3.astype(o_ref.dtype)


def prepare_params(params):
    """One-time pad (hidden dim -> mult of 128) and bf16 cast of the weights.

    Do this once at init / checkpoint load; the per-step forward then reads
    these arrays directly with no extra HBM copy passes.
    """
    w1, b1, w2, b2, w3, b3 = params
    D, H = w1.shape
    Hp = _round_up(H, 128)
    w1p = jnp.zeros((D, Hp), jnp.bfloat16).at[:, :H].set(w1.astype(jnp.bfloat16))
    w2p = jnp.zeros((Hp, Hp), jnp.bfloat16).at[:H, :H].set(w2.astype(jnp.bfloat16))
    w3p = jnp.zeros((Hp, D), jnp.bfloat16).at[:H, :].set(w3.astype(jnp.bfloat16))
    b1p = jnp.zeros((1, Hp), jnp.float32).at[:, :H].set(b1.astype(jnp.float32).reshape(1, H))
    b2p = jnp.zeros((1, Hp), jnp.float32).at[:, :H].set(b2.astype(jnp.float32).reshape(1, H))
    b3p = b3.astype(jnp.float32).reshape(1, D)
    return (w1p, b1p, w2p, b2p, w3p, b3p)


def _choose_batch_tile(B: int, block_b: int) -> int:
    if B > block_b:
        return block_b                      # block_b is a multiple of 8
    if B >= 16:
        # Prefer >= 2 grid blocks so the "parallel" batch axis can feed both
        # v7x TensorCores (harmless single-TC on v5e/v6e).
        tb = _round_up(-(-B // 2), 8)
        if tb < B:
            return tb
    return B                                # single block; TB == full dim is legal


def diffusion_model_forward(x, t, prepared_params, *, block_b: int = 512):
    """x: (B, latent_dim) float32; t: unused (matches the PyTorch module)."""
    del t  # timestep is accepted but unused in the reference forward
    w1p, b1p, w2p, b2p, w3p, b3p = prepared_params
    B, D = x.shape
    Hp = w1p.shape[1]
    assert w1p.shape[0] == D and w3p.shape[1] == D

    TB = _choose_batch_tile(B, block_b)
    n_blocks = pl.cdiv(B, TB)

    def _resident(shape):
        # Constant index_map -> stays VMEM-resident; single-buffered (no point
        # double-buffering something that never changes).
        return pl.BlockSpec(shape, lambda i: (0, 0), pipeline_mode=pl.Buffered(1))

    # Cost estimate (advisory).
    flops = 2 * B * (D * Hp + Hp * Hp + Hp * D)
    weight_bytes = (w1p.size + w2p.size + w3p.size) * 2 \
        + (b1p.size + b2p.size + b3p.size) * 4
    bytes_accessed = x.size * 4 + B * D * 4 + weight_bytes

    # Explicit VMEM budget: resident weights (single-buffered) + double-buffered
    # x/out tiles + f32 intermediates + headroom; clamped to v7x's 64 MiB.
    tile_bytes = 2 * 2 * TB * D * 4          # x + out, double-buffered, f32
    interm_bytes = 2 * TB * Hp * 4           # h1/h2 f32 temporaries
    vmem_limit = int(min(64 << 20,
                         max(16 << 20,
                             weight_bytes + tile_bytes + interm_bytes + (4 << 20))))

    out = pl.pallas_call(
        _mlp_kernel,
        out_shape=jax.ShapeDtypeStruct((B, D), x.dtype),
        grid_spec=pltpu.PrefetchScalarGridSpec(
            num_scalar_prefetch=0,
            grid=(n_blocks,),
            in_specs=[
                pl.BlockSpec((TB, D), lambda i: (i, 0)),   # x: tiled over batch, unpadded
                _resident((D, Hp)),                         # w1
                _resident((1, Hp)),                         # b1
                _resident((Hp, Hp)),                        # w2
                _resident((1, Hp)),                         # b2
                _resident((Hp, D)),                         # w3
                _resident((1, D)),                          # b3
            ],
            out_specs=pl.BlockSpec((TB, D), lambda i: (i, 0)),   # unpadded output
        ),
        compiler_params=pltpu.CompilerParams(
            dimension_semantics=("parallel",),               # megacore on v7x
            vmem_limit_bytes=vmem_limit,
        ),
        cost_estimate=pl.CostEstimate(
            flops=flops, transcendentals=0, bytes_accessed=bytes_accessed),
    )(x, w1p, b1p, w2p, b2p, w3p, b3p)

    return out


def init_params(latent_dim, key):
    """Deterministic init mirroring nn.Linear shapes (stored transposed)."""
    H = latent_dim * 2
    ks = jax.random.split(key, 6)
    scale1 = 1.0 / jnp.sqrt(latent_dim)
    scale2 = 1.0 / jnp.sqrt(H)
    w1 = jax.random.uniform(ks[0], (latent_dim, H), jnp.float32, -scale1, scale1)
    b1 = jax.random.uniform(ks[1], (1, H), jnp.float32, -scale1, scale1)
    w2 = jax.random.uniform(ks[2], (H, H), jnp.float32, -scale2, scale2)
    b2 = jax.random.uniform(ks[3], (1, H), jnp.float32, -scale2, scale2)
    w3 = jax.random.uniform(ks[4], (H, latent_dim), jnp.float32, -scale2, scale2)
    b3 = jax.random.uniform(ks[5], (1, latent_dim), jnp.float32, -scale2, scale2)
    return (w1, b1, w2, b2, w3, b3)


def reference_forward(x, params):
    """Plain-JAX reference matching the kernel's bf16-operand / f32-accumulate numerics."""
    w1, b1, w2, b2, w3, b3 = params
    f32 = jnp.float32
    xb = x.astype(jnp.bfloat16).astype(f32)
    h = jax.nn.relu(xb @ w1.astype(jnp.bfloat16).astype(f32) + b1)
    h = h.astype(jnp.bfloat16).astype(f32)
    h = jax.nn.relu(h @ w2.astype(jnp.bfloat16).astype(f32) + b2)
    h = h.astype(jnp.bfloat16).astype(f32)
    return h @ w3.astype(jnp.bfloat16).astype(f32) + b3


if __name__ == "__main__":
    key = jax.random.PRNGKey(0)
    latent_dim = 32
    batch = 8

    kx, kt, kp = jax.random.split(key, 3)
    x = jax.random.normal(kx, (batch, latent_dim), jnp.float32)
    t = jax.random.randint(kt, (batch,), 0, 1000)   # timestep (unused, as in reference)
    params = init_params(latent_dim, kp)
    prepared = prepare_params(params)               # pad/cast weights once, not per call

    out = diffusion_model_forward(x, t, prepared)
    out = jax.block_until_ready(out)

    ref = reference_forward(x, params)
    assert out.shape == (batch, latent_dim)
    assert jnp.allclose(out, ref, atol=1e-2, rtol=1e-2), "mismatch vs reference"

    print("KERNEL_OK")
</pallas_src>

<mosaic_0001>
module attributes {stable_mosaic.version = 11 : i64} {
  func.func @_mlp_kernel(%arg0: i32, %arg1: memref<8x32xf32, #tpu.memory_space<vmem>>, %arg2: memref<32x128xbf16, #tpu.memory_space<vmem>>, %arg3: memref<1x128xf32, #tpu.memory_space<vmem>>, %arg4: memref<128x128xbf16, #tpu.memory_space<vmem>>, %arg5: memref<1x128xf32, #tpu.memory_space<vmem>>, %arg6: memref<128x32xbf16, #tpu.memory_space<vmem>>, %arg7: memref<1x32xf32, #tpu.memory_space<vmem>>, %arg8: memref<8x32xf32, #tpu.memory_space<vmem>>) attributes {dimension_semantics = [#tpu.dimension_semantics<parallel>], iteration_bounds = array<i64: 1>, scalar_prefetch = 0 : i64, scratch_operands = 0 : i64, tpu.core_type = #tpu.core_type<tc>, window_params = [{transform_indices = @transform_0, window_bounds = array<i64: 8, 32>}, {pipeline_mode = #tpu.pipeline_mode<synchronous>, transform_indices = @transform_1, window_bounds = array<i64: 32, 128>}, {pipeline_mode = #tpu.pipeline_mode<synchronous>, transform_indices = @transform_2, window_bounds = array<i64: 1, 128>}, {pipeline_mode = #tpu.pipeline_mode<synchronous>, transform_indices = @transform_3, window_bounds = array<i64: 128, 128>}, {pipeline_mode = #tpu.pipeline_mode<synchronous>, transform_indices = @transform_4, window_bounds = array<i64: 1, 128>}, {pipeline_mode = #tpu.pipeline_mode<synchronous>, transform_indices = @transform_5, window_bounds = array<i64: 128, 32>}, {pipeline_mode = #tpu.pipeline_mode<synchronous>, transform_indices = @transform_6, window_bounds = array<i64: 1, 32>}, {transform_indices = @transform_7, window_bounds = array<i64: 8, 32>}]} {
    %c0 = arith.constant 0 : index
    %c0_0 = arith.constant 0 : index
    %0 = vector.load %arg1[%c0, %c0_0] : memref<8x32xf32, #tpu.memory_space<vmem>>, vector<8x32xf32>
    %1 = arith.truncf %0 : vector<8x32xf32> to vector<8x32xbf16>
    %c0_1 = arith.constant 0 : index
    %c0_2 = arith.constant 0 : index
    %2 = vector.load %arg2[%c0_1, %c0_2] : memref<32x128xbf16, #tpu.memory_space<vmem>>, vector<32x128xbf16>
    %cst = arith.constant dense<0.000000e+00> : vector<8x128xf32>
    %3 = tpu.matmul %1, %2, %cst {dimension_numbers = #tpu.dot_dimension_numbers<[1], [0], [0], [1], [0, 0, 1, 1], [], []>} : vector<8x32xbf16>, vector<32x128xbf16>, vector<8x128xf32> -> vector<8x128xf32>
    %c0_3 = arith.constant 0 : index
    %c0_4 = arith.constant 0 : index
    %4 = vector.load %arg3[%c0_3, %c0_4] : memref<1x128xf32, #tpu.memory_space<vmem>>, vector<1x128xf32>
    %5 = vector.broadcast %4 : vector<1x128xf32> to vector<8x128xf32>
    %6 = arith.addf %3, %5 : vector<8x128xf32>
    %cst_5 = arith.constant 0.000000e+00 : f32
    %7 = vector.broadcast %cst_5 : f32 to vector<8x128xf32>
    %8 = arith.maximumf %6, %7 : vector<8x128xf32>
    %9 = arith.truncf %8 : vector<8x128xf32> to vector<8x128xbf16>
    %c0_6 = arith.constant 0 : index
    %c0_7 = arith.constant 0 : index
    %10 = vector.load %arg4[%c0_6, %c0_7] : memref<128x128xbf16, #tpu.memory_space<vmem>>, vector<128x128xbf16>
    %cst_8 = arith.constant dense<0.000000e+00> : vector<8x128xf32>
    %11 = tpu.matmul %9, %10, %cst_8 {dimension_numbers = #tpu.dot_dimension_numbers<[1], [0], [0], [1], [0, 0, 1, 1], [], []>} : vector<8x128xbf16>, vector<128x128xbf16>, vector<8x128xf32> -> vector<8x128xf32>
    %c0_9 = arith.constant 0 : index
    %c0_10 = arith.constant 0 : index
    %12 = vector.load %arg5[%c0_9, %c0_10] : memref<1x128xf32, #tpu.memory_space<vmem>>, vector<1x128xf32>
    %13 = vector.broadcast %12 : vector<1x128xf32> to vector<8x128xf32>
    %14 = arith.addf %11, %13 : vector<8x128xf32>
    %cst_11 = arith.constant 0.000000e+00 : f32
    %15 = vector.broadcast %cst_11 : f32 to vector<8x128xf32>
    %16 = arith.maximumf %14, %15 : vector<8x128xf32>
    %17 = arith.truncf %16 : vector<8x128xf32> to vector<8x128xbf16>
    %c0_12 = arith.constant 0 : index
    %c0_13 = arith.constant 0 : index
    %18 = vector.load %arg6[%c0_12, %c0_13] : memref<128x32xbf16, #tpu.memory_space<vmem>>, vector<128x32xbf16>
    %cst_14 = arith.constant dense<0.000000e+00> : vector<8x32xf32>
    %19 = tpu.matmul %17, %18, %cst_14 {dimension_numbers = #tpu.dot_dimension_numbers<[1], [0], [0], [1], [0, 0, 1, 1], [], []>} : vector<8x128xbf16>, vector<128x32xbf16>, vector<8x32xf32> -> vector<8x32xf32>
    %c0_15 = arith.constant 0 : index
    %c0_16 = arith.constant 0 : index
    %20 = vector.load %arg7[%c0_15, %c0_16] : memref<1x32xf32, #tpu.memory_space<vmem>>, vector<1x32xf32>
    %21 = vector.broadcast %20 : vector<1x32xf32> to vector<8x32xf32>
    %22 = arith.addf %19, %21 : vector<8x32xf32>
    %c0_17 = arith.constant 0 : index
    %c0_18 = arith.constant 0 : index
    %23 = vector.load %arg8[%c0_17, %c0_18] : memref<8x32xf32, #tpu.memory_space<vmem>>, vector<8x32xf32>
    tpu.vector_store %arg8[%c0_17, %c0_18], %22 {strides = array<i32>} : memref<8x32xf32, #tpu.memory_space<vmem>>, vector<8x32xf32>,
    return
  }
  func.func @transform_0(%arg0: i32) -> (i32, i32) {
    %c0_i32 = arith.constant 0 : i32
    %c0_i32_0 = arith.constant 0 : i32
    return %arg0, %c0_i32 : i32, i32
  }
  func.func @transform_1(%arg0: i32) -> (i32, i32) {
    %c0_i32 = arith.constant 0 : i32
    %c0_i32_0 = arith.constant 0 : i32
    %c0_i32_1 = arith.constant 0 : i32
    return %c0_i32, %c0_i32_0 : i32, i32
  }
  func.func @transform_2(%arg0: i32) -> (i32, i32) {
    %c0_i32 = arith.constant 0 : i32
    %c0_i32_0 = arith.constant 0 : i32
    %c0_i32_1 = arith.constant 0 : i32
    return %c0_i32, %c0_i32_0 : i32, i32
  }
  func.func @transform_3(%arg0: i32) -> (i32, i32) {
    %c0_i32 = arith.constant 0 : i32
    %c0_i32_0 = arith.constant 0 : i32
    %c0_i32_1 = arith.constant 0 : i32
    return %c0_i32, %c0_i32_0 : i32, i32
  }
  func.func @transform_4(%arg0: i32) -> (i32, i32) {
    %c0_i32 = arith.constant 0 : i32
    %c0_i32_0 = arith.constant 0 : i32
    %c0_i32_1 = arith.constant 0 : i32
    return %c0_i32, %c0_i32_0 : i32, i32
  }
  func.func @transform_5(%arg0: i32) -> (i32, i32) {
    %c0_i32 = arith.constant 0 : i32
    %c0_i32_0 = arith.constant 0 : i32
    %c0_i32_1 = arith.constant 0 : i32
    return %c0_i32, %c0_i32_0 : i32, i32
  }
  func.func @transform_6(%arg0: i32) -> (i32, i32) {
    %c0_i32 = arith.constant 0 : i32
    %c0_i32_0 = arith.constant 0 : i32
    %c0_i32_1 = arith.constant 0 : i32
    return %c0_i32, %c0_i32_0 : i32, i32
  }
  func.func @transform_7(%arg0: i32) -> (i32, i32) {
    %c0_i32 = arith.constant 0 : i32
    %c0_i32_0 = arith.constant 0 : i32
    return %arg0, %c0_i32 : i32, i32
  }
}

</mosaic_0001>

<llo_original>
// kernel: tpu_custom_call.1
$region0: #{tpu_custom_call.1}
  #allocation0 [shape = 'u32[]', space=smem, size = 0x4, offset = 0x4, fixed_abs, tag = 'smem constant byte address 0x4 - core index']
  #allocation1 [shape = 'u32[72,128]{1,0:T(1,128)}', space=vmem, size = 0x9000, scoped, tag = 'internal scratch']
  %s0 = inlined_call_operand.hbm [shape: f32[8,32], index: 0, kind: input, shape index: {}]
  %s1 = inlined_call_operand.vmem [shape: bf16[32,128], index: 1, kind: input, shape index: {}]
  %s2 = inlined_call_operand.vmem [shape: f32[1,128], index: 2, kind: input, shape index: {}]
  %s3 = inlined_call_operand.vmem [shape: bf16[128,128], index: 3, kind: input, shape index: {}]
  %s4 = inlined_call_operand.vmem [shape: f32[1,128], index: 4, kind: input, shape index: {}]
  %s5 = inlined_call_operand.vmem [shape: bf16[128,32], index: 5, kind: input, shape index: {}]
  %s6 = inlined_call_operand.vmem [shape: f32[1,32], index: 6, kind: input, shape index: {}]
  %s7 = inlined_call_operand.hbm [shape: f32[8,32], index: 7, kind: output, shape index: {}]
  %s8 = sld [smem:[#allocation0]]
  $region42: #{tpu_custom_call.1} parent=0
    _
  %s10 = ssub.s32 1, %s8
  %s11 = scalar_select 0, %s10, %s8
  $region1: #{tpu_custom_call.1} parent=0
    #allocation2 [shape = 'u8[4096]{0}', space=vmem, size = 0x1000, scoped, tag = 'input window, operand 0, single buffered']
    #allocation3 [shape = 's32[1]{0}', space=sflag, size = 0x4, scoped, tag = 'scoped memory for tpu_custom_call.1']
    #allocation4 [shape = 's32[1]{0}', space=sflag, size = 0x4, scoped, tag = 'scoped memory for tpu_custom_call.1']
    #allocation5 [shape = 'u8[4096]{0}', space=vmem, size = 0x1000, scoped, tag = 'output window, operand 0, single buffered']
    %12 = vsyncpa [#allocation3], 0
    %13 = vsyncpa [#allocation4], 0
    // Predicated region
    $region2: #{tpu_custom_call.1} parent=1 // pred_check
      _
    $region3: #{tpu_custom_call.1} parent=1 // pred_check_branch
      %15 = sbr.rel (0) target = $region5
    $region4: #{tpu_custom_call.1} parent=1 // pred_region
      %17 = vsyncadd [#allocation3], 0
      %s19 = sshll.u32 %s0, 4
      %s20 = int_to_ptr.hbm [resolvable:$true] %s19
      %s21 = sshll.u32 [#allocation2], 4
      %s22 = int_to_ptr.vmem [resolvable:$true] %s21
      %24 = dma.hbm_to_vmem [thread:$0]  %s20, 128, %s22, [#allocation3]
    $region5: #{tpu_custom_call.1} parent=1 // pred_fallthru
      _
    // Predicated region
    $region6: #{tpu_custom_call.1} parent=1 // pred_check
      _
    $region7: #{tpu_custom_call.1} parent=1 // pred_check_branch
      %26 = sbr.rel (0) target = $region9
    $region8: #{tpu_custom_call.1} parent=1 // pred_region
      _
    $region9: #{tpu_custom_call.1} parent=1 // pred_fallthru
      _
    // Predicated region
    $region10: #{tpu_custom_call.1} parent=1 // pred_check
      _
    $region11: #{tpu_custom_call.1} parent=1 // pred_check_branch
      %28 = sbr.rel (0) target = $region13
    $region12: #{tpu_custom_call.1} parent=1 // pred_region
      _
    $region13: #{tpu_custom_call.1} parent=1 // pred_fallthru
      _
    // Predicated region
    $region14: #{tpu_custom_call.1} parent=1 // pred_check
      _
    $region15: #{tpu_custom_call.1} parent=1 // pred_check_branch
      %30 = sbr.rel (0) target = $region17
    $region16: #{tpu_custom_call.1} parent=1 // pred_region
      _
    $region17: #{tpu_custom_call.1} parent=1 // pred_fallthru
      _
    // Predicated region
    $region18: #{tpu_custom_call.1} parent=1 // pred_check
      _
    $region19: #{tpu_custom_call.1} parent=1 // pred_check_branch
      %32 = sbr.rel (0) target = $region21
    $region20: #{tpu_custom_call.1} parent=1 // pred_region
      _
    $region21: #{tpu_custom_call.1} parent=1 // pred_fallthru
      _
    // Predicated region
    $region22: #{tpu_custom_call.1} parent=1 // pred_check
      _
    $region23: #{tpu_custom_call.1} parent=1 // pred_check_branch
      %34 = sbr.rel (0) target = $region25
    $region24: #{tpu_custom_call.1} parent=1 // pred_region
      _
    $region25: #{tpu_custom_call.1} parent=1 // pred_fallthru
      _
    // Predicated region
    $region26: #{tpu_custom_call.1} parent=1 // pred_check
      _
    $region27: #{tpu_custom_call.1} parent=1 // pred_check_branch
      %36 = sbr.rel (0) target = $region29
    $region28: #{tpu_custom_call.1} parent=1 // pred_region
      _
    $region29: #{tpu_custom_call.1} parent=1 // pred_fallthru
      _
    // Predicated region
    $region30: #{tpu_custom_call.1} parent=1 // pred_check
      _
    $region31: #{tpu_custom_call.1} parent=1 // pred_check_branch
      %38 = sbr.rel (0) target = $region33
    $region32: #{tpu_custom_call.1} parent=1 // pred_region
      %40 = dma.done [#allocation3], 128
    $region33: #{tpu_custom_call.1} parent=1 // pred_fallthru
      _
    %v42 = vld [vmem:[#allocation2] sm:$0xff]
    %v43 = vpack.c.bf16 %v42, %v42
    %v44 = vld [vmem:[%s1] sm:$0xf]
    %v45 = vld [vmem:[%s1 + $0x4] sm:$0xf]
    %v46 = vld [vmem:[%s1 + $0x8] sm:$0xf]
    %v47 = vld [vmem:[%s1 + $0xc] sm:$0xf]
    %v48 = vld [vmem:[%s2] sm:$0x1]
    %v50 = vperm.slane %v48, 0
    %v56 = vunpack.c.l.b16 %v44
    %v57 = vunpack.c.l.b16 %v45
    %v58 = vunpack.c.l.b16 %v46
    %v59 = vunpack.c.l.b16 %v47
    %v60 = vpack.c.b16 %v57, %v56
    %v61 = vpack.c.b16 %v59, %v58
    %vm64 = vcmask 261120
    %v66 = vsel %vm64, %v43, 0
    %68 = vmatpush.bf16.msra.mxu0 0
    %69 = vmatpush.bf16.msra.mxu0 0
    %70 = vmatpush.bf16.msra.mxu0 0
    %71 = vmatpush.bf16.msra.mxu0 0
    %72 = vmatpush.bf16.msra.mxu0 0
    %73 = vmatpush.bf16.msra.mxu0 0
    %74 = vmatpush.bf16.msra.mxu0 %v61
    %75 = vmatpush.bf16.msra.mxu0 %v60
    %76 = vmatmul.bf16.gmra.mxu0 %v66
    %v77 = vpop.f32.mrf.mxu0
    %v78 = vadd.f32 %v50, %v77
    %v79 = vpop.f32.mrf.mxu0
    %80 = vdwg.mxu0
    %v81 = vmax.f32 %v78, 0.0
    %v82 = vpack.c.bf16 %v81, %v81
    %v83 = vld [vmem:[%s3] sm:$0xf]
    %v84 = vld [vmem:[%s3 + $0x4] sm:$0xf]
    %v85 = vld [vmem:[%s3 + $0x8] sm:$0xf]
    %v86 = vld [vmem:[%s3 + $0xc] sm:$0xf]
    %v87 = vld [vmem:[%s3 + $0x10] sm:$0xf]
    %v88 = vld [vmem:[%s3 + $0x14] sm:$0xf]
    %v89 = vld [vmem:[%s3 + $0x18] sm:$0xf]
    %v90 = vld [vmem:[%s3 + $0x1c] sm:$0xf]
    %v91 = vld [vmem:[%s3 + $0x20] sm:$0xf]
    %v92 = vld [vmem:[%s3 + $0x24] sm:$0xf]
    %v93 = vld [vmem:[%s3 + $0x28] sm:$0xf]
    %v94 = vld [vmem:[%s3 + $0x2c] sm:$0xf]
    %v95 = vld [vmem:[%s3 + $0x30] sm:$0xf]
    %v96 = vld [vmem:[%s3 + $0x34] sm:$0xf]
    %v97 = vld [vmem:[%s3 + $0x38] sm:$0xf]
    %v98 = vld [vmem:[%s3 + $0x3c] sm:$0xf]
    %v99 = vld [vmem:[%s4] sm:$0x1]
    %v101 = vperm.slane %v99, 0
    %v119 = vunpack.c.l.b16 %v83
    %v120 = vunpack.c.l.b16 %v84
    %v121 = vunpack.c.l.b16 %v85
    %v122 = vunpack.c.l.b16 %v86
    %v123 = vunpack.c.l.b16 %v87
    %v124 = vunpack.c.l.b16 %v88
    %v125 = vunpack.c.l.b16 %v89
    %v126 = vunpack.c.l.b16 %v90
    %v127 = vunpack.c.l.b16 %v91
    %v128 = vunpack.c.l.b16 %v92
    %v129 = vunpack.c.l.b16 %v93
    %v130 = vunpack.c.l.b16 %v94
    %v131 = vunpack.c.l.b16 %v95
    %v132 = vunpack.c.l.b16 %v96
    %v133 = vunpack.c.l.b16 %v97
    %v134 = vunpack.c.l.b16 %v98
    %v135 = vpack.c.b16 %v120, %v119
    %v136 = vpack.c.b16 %v122, %v121
    %v137 = vpack.c.b16 %v124, %v123
    %v138 = vpack.c.b16 %v126, %v125
    %v139 = vpack.c.b16 %v128, %v127
    %v140 = vpack.c.b16 %v130, %v129
    %v141 = vpack.c.b16 %v132, %v131
    %v142 = vpack.c.b16 %v134, %v133
    %151 = vmatpush.bf16.msra.mxu0 %v142
    %152 = vmatpush.bf16.msra.mxu0 %v141
    %153 = vmatpush.bf16.msra.mxu0 %v140
    %154 = vmatpush.bf16.msra.mxu0 %v139
    %155 = vmatpush.bf16.msra.mxu0 %v138
    %156 = vmatpush.bf16.msra.mxu0 %v137
    %157 = vmatpush.bf16.msra.mxu0 %v136
    %158 = vmatpush.bf16.msra.mxu0 %v135
    %159 = vmatmul.bf16.gmra.mxu0 %v82
    %v160 = vpop.f32.mrf.mxu0
    %v161 = vadd.f32 %v101, %v160
    %v162 = vpop.f32.mrf.mxu0
    %163 = vdwg.mxu0
    %v164 = vmax.f32 %v161, 0.0
    %v165 = vpack.c.bf16 %v164, %v164
    %v166 = vld [vmem:[%s5] sm:$0xf]
    %v167 = vld [vmem:[%s5 + $0x4] sm:$0xf]
    %v168 = vld [vmem:[%s5 + $0x8] sm:$0xf]
    %v169 = vld [vmem:[%s5 + $0xc] sm:$0xf]
    %v170 = vld [vmem:[%s5 + $0x10] sm:$0xf]
    %v171 = vld [vmem:[%s5 + $0x14] sm:$0xf]
    %v172 = vld [vmem:[%s5 + $0x18] sm:$0xf]
    %v173 = vld [vmem:[%s5 + $0x1c] sm:$0xf]
    %v174 = vld [vmem:[%s5 + $0x20] sm:$0xf]
    %v175 = vld [vmem:[%s5 + $0x24] sm:$0xf]
    %v176 = vld [vmem:[%s5 + $0x28] sm:$0xf]
    %v177 = vld [vmem:[%s5 + $0x2c] sm:$0xf]
    %v178 = vld [vmem:[%s5 + $0x30] sm:$0xf]
    %v179 = vld [vmem:[%s5 + $0x34] sm:$0xf]
    %v180 = vld [vmem:[%s5 + $0x38] sm:$0xf]
    %v181 = vld [vmem:[%s5 + $0x3c] sm:$0xf]
    %v182 = vld [vmem:[%s6] sm:$0x1]
    %v184 = vperm.slane %v182, 0
    %v202 = vunpack.c.l.b16 %v166
    %v203 = vunpack.c.l.b16 %v167
    %v204 = vunpack.c.l.b16 %v168
    %v205 = vunpack.c.l.b16 %v169
    %v206 = vunpack.c.l.b16 %v170
    %v207 = vunpack.c.l.b16 %v171
    %v208 = vunpack.c.l.b16 %v172
    %v209 = vunpack.c.l.b16 %v173
    %v210 = vunpack.c.l.b16 %v174
    %v211 = vunpack.c.l.b16 %v175
    %v212 = vunpack.c.l.b16 %v176
    %v213 = vunpack.c.l.b16 %v177
    %v214 = vunpack.c.l.b16 %v178
    %v215 = vunpack.c.l.b16 %v179
    %v216 = vunpack.c.l.b16 %v180
    %v217 = vunpack.c.l.b16 %v181
    %v218 = vpack.c.b16 %v203, %v202
    %v219 = vpack.c.b16 %v205, %v204
    %v220 = vpack.c.b16 %v207, %v206
    %v221 = vpack.c.b16 %v209, %v208
    %v222 = vpack.c.b16 %v211, %v210
    %v223 = vpack.c.b16 %v213, %v212
    %v224 = vpack.c.b16 %v215, %v214
    %v225 = vpack.c.b16 %v217, %v216
    %234 = vmatpush.bf16.msra.mxu0 %v225
    %235 = vmatpush.bf16.msra.mxu0 %v224
    %236 = vmatpush.bf16.msra.mxu0 %v223
    %237 = vmatpush.bf16.msra.mxu0 %v222
    %238 = vmatpush.bf16.msra.mxu0 %v221
    %239 = vmatpush.bf16.msra.mxu0 %v220
    %240 = vmatpush.bf16.msra.mxu0 %v219
    %241 = vmatpush.bf16.msra.mxu0 %v218
    %242 = vmatmul.bf16.gmra.mxu0 %v165
    %v243 = vpop.f32.mrf.mxu0
    %v244 = vadd.f32 %v184, %v243
    %v245 = vpop.f32.mrf.mxu0
    %246 = vdwg.mxu0
    %247 = vst.msk [vmem:[#allocation5] sm:$0xff] %vm64, %v244
    // Predicated region
    $region34: #{tpu_custom_call.1} parent=1 // pred_check
      _
    $region35: #{tpu_custom_call.1} parent=1 // pred_check_branch
      %249 = sbr.rel (0) target = $region37
    $region36: #{tpu_custom_call.1} parent=1 // pred_region
      %251 = vsyncadd [#allocation4], 0
      %s253 = sshll.u32 [#allocation5], 4
      %s254 = int_to_ptr.vmem [resolvable:$true] %s253
      %s255 = sshll.u32 %s7, 4
      %s256 = int_to_ptr.hbm [resolvable:$true] %s255
      %258 = dma.vmem_to_hbm [thread:$0]  %s254, 128, %s256, [#allocation4]
    $region37: #{tpu_custom_call.1} parent=1 // pred_fallthru
      _
    // Predicated region
    $region38: #{tpu_custom_call.1} parent=1 // pred_check
      _
    $region39: #{tpu_custom_call.1} parent=1 // pred_check_branch
      %260 = sbr.rel (0) target = $region41
    $region40: #{tpu_custom_call.1} parent=1 // pred_region
      %262 = dma.done [#allocation4], 128
    $region41: #{tpu_custom_call.1} parent=1 // pred_fallthru
      _
    %263 = vsyncpa [#allocation3], 1
    %264 = vsyncpa [#allocation4], 1

</llo_original>
